<compile_context>
chip_gen: v6e
topology: v6e:2x2x1
jax: 0.10.0
libtpu: 0.0.40
codegen_flags: <defaults>
</compile_context>

<pallas_src>
import functools

import jax
import jax.numpy as jnp
from jax import lax
from jax.experimental import pallas as pl
from jax.experimental.pallas import tpu as pltpu

N_CLASSES = 4        # output channels of each head
N_HEADS = 2          # model / ema_model each return 2 outputs
XI = 10.0
EPI = 6.0
IP = 1
DICE_EP = 1e-8       # Binary_dice_loss eps
NORM_EPS = 1e-8      # _l2_normalize eps

VMEM_BUDGET_BYTES = 24 << 20   # headroom below v7x's 32 MiB scoped default


def _pick_tile(s, tile_cols, bytes_per_col):
    """Column tile (lane dim): as large as the VMEM budget allows.

    Working set per column = double-buffered input blocks + the VMEM-resident
    accumulator column; capping keeps a v6e-tuned tile from overflowing v7x.
    """
    cap = max(VMEM_BUDGET_BYTES // max(bytes_per_col, 1), 128)
    tile_cols = min(tile_cols, cap)
    if s <= tile_cols:
        return s
    return max((tile_cols // 128) * 128, 128)


# ----------------------------------------------------------------------------
# Pallas kernel 1: tiled per-sample sum of squares (for _l2_normalize).
# The sample is viewed as a sublane-full (rows=8, L) slab; grid = (B, tiles);
# partial squares accumulate in the VMEM-resident (rows, Tc) output block and
# the tiny final reduce happens outside.
# ----------------------------------------------------------------------------
def _sumsq_kernel(l_total, needs_mask, x_ref, out_ref):
    t = pl.program_id(1)

    @pl.when(t == 0)
    def _():
        out_ref[...] = jnp.zeros_like(out_ref)

    v = x_ref[...].astype(jnp.float32)
    sq = v * v

    if needs_mask:
        tc = x_ref.shape[-1]
        last = t == pl.num_programs(1) - 1

        @pl.when(last)                           # mask only the partial tile
        def _():
            ids = lax.broadcasted_iota(jnp.int32, sq.shape, 1)
            out_ref[...] += jnp.where(t * tc + ids < l_total, sq, 0.0)

        @pl.when(jnp.logical_not(last))
        def _():
            out_ref[...] += sq
    else:
        out_ref[...] += sq


def sample_sumsq(x3, *, tile_cols=65536):
    b = x3.shape[0]
    total = 1
    for dim in x3.shape[1:]:
        total *= dim
    rows = 8 if total % 8 == 0 else 1            # full 8-sublane occupancy
    l = total // rows
    arr = x3.reshape(b, rows, l)

    itemsize = jnp.dtype(arr.dtype).itemsize
    bytes_per_col = rows * itemsize * 2 + rows * 4   # dbl-buffered in + f32 out
    tc = _pick_tile(l, tile_cols, bytes_per_col)
    t = pl.cdiv(l, tc)

    kernel = functools.partial(_sumsq_kernel, l, (l % tc) != 0)
    out = pl.pallas_call(
        kernel,
        out_shape=jax.ShapeDtypeStruct((b, rows, tc), jnp.float32),
        grid=(b, t),
        in_specs=[pl.BlockSpec((None, rows, tc), lambda i, j: (i, 0, j))],
        out_specs=pl.BlockSpec((None, rows, tc), lambda i, j: (i, 0, 0)),
        compiler_params=pltpu.CompilerParams(
            dimension_semantics=("parallel", "arbitrary")),
    )(arr)
    return jnp.sum(out, axis=(1, 2))             # (B,)


# ----------------------------------------------------------------------------
# Pallas kernel 2: fused VAT final pass.
#   perturb (x + scale_b * d) -> both student heads -> softmax
#   and            x          -> both ema heads    -> softmax
#   then accumulate only the two cross products needed for
#   lds = loss(p0, q1) + loss(p1, q0)   (dice unions are analytic: B*S each).
# ----------------------------------------------------------------------------
def _vat_pair_dice_kernel(s_total, needs_mask,
                          scales_ref, x_ref, d_ref,
                          wm_ref, bm_ref, we_ref, be_ref,
                          out_ref):
    b = pl.program_id(0)
    t = pl.program_id(1)

    @pl.when(t == 0)
    def _():
        out_ref[...] = jnp.zeros_like(out_ref)

    scale = scales_ref[b]                        # epi / (||g_b|| + eps), SMEM
    xb = x_ref[...].astype(jnp.float32)          # (C, Tc) unperturbed features
    xp = xb + scale * d_ref[...].astype(jnp.float32)

    # Both heads in one MXU matmul per tower: (2N, C) @ (C, Tc) -> (2N, Tc).
    lm = jnp.dot(wm_ref[...], xp, preferred_element_type=jnp.float32) + bm_ref[...]
    le = jnp.dot(we_ref[...], xb, preferred_element_type=jnp.float32) + be_ref[...]

    n = N_CLASSES
    row_is_h0 = lax.broadcasted_iota(jnp.int32, (2 * n, 1), 0) < n

    def stacked_softmax(logits):                 # per-head softmax, full 8-sublane
        m0 = jnp.max(logits[0:n], axis=0, keepdims=True)       # (1, Tc)
        m1 = jnp.max(logits[n:], axis=0, keepdims=True)
        e = jnp.exp(logits - jnp.where(row_is_h0, m0, m1))     # one exp, (2N, Tc)
        s0 = jnp.sum(e[0:n], axis=0, keepdims=True)
        s1 = jnp.sum(e[n:], axis=0, keepdims=True)
        r = jnp.where(row_is_h0,
                      pl.reciprocal(s0, approx=True),
                      pl.reciprocal(s1, approx=True))
        return e * r                                            # [h0 probs; h1 probs]

    p_all = stacked_softmax(lm)                  # [p0; p1]  (2N, Tc)
    q_all = stacked_softmax(le)                  # [q0; q1]
    q_swap = pltpu.roll(q_all, shift=n, axis=0)  # [q1; q0]   (XLU, free-ish)
    prod = p_all * q_swap                        # rows 0:N -> p0*q1, N:2N -> p1*q0

    if needs_mask:
        tc = x_ref.shape[-1]
        last = t == pl.num_programs(1) - 1

        @pl.when(last)                           # mask post-product: no NaN leak
        def _():
            ids = lax.broadcasted_iota(jnp.int32, prod.shape, 1)
            out_ref[...] += jnp.where(t * tc + ids < s_total, prod, 0.0)

        @pl.when(jnp.logical_not(last))
        def _():
            out_ref[...] += prod
    else:
        out_ref[...] += prod


def pair_dice_sums(x3, d3, scales, wm, bm, we, be, *, tile_cols=65536):
    b, c, s = x3.shape
    itemsize = jnp.dtype(x3.dtype).itemsize
    # 2 inputs x 2 buffers x (C cols) + resident (2N, Tc) f32 accumulator.
    bytes_per_col = 2 * 2 * c * itemsize + 2 * N_CLASSES * 4
    tc = _pick_tile(s, tile_cols, bytes_per_col)
    t = pl.cdiv(s, tc)

    kernel = functools.partial(_vat_pair_dice_kernel, s, (s % tc) != 0)
    out = pl.pallas_call(
        kernel,
        out_shape=jax.ShapeDtypeStruct((b, 2 * N_CLASSES, tc), jnp.float32),
        grid=(b, t),
        in_specs=[
            pl.BlockSpec(memory_space=pltpu.MemorySpace.SMEM),        # scales (B,)
            pl.BlockSpec((None, c, tc), lambda i, j: (i, 0, j)),      # x rows
            pl.BlockSpec((None, c, tc), lambda i, j: (i, 0, j)),      # d rows
            pl.BlockSpec((2 * N_CLASSES, c), lambda i, j: (0, 0)),    # student W
            pl.BlockSpec((2 * N_CLASSES, 1), lambda i, j: (0, 0)),    # student b
            pl.BlockSpec((2 * N_CLASSES, c), lambda i, j: (0, 0)),    # ema W
            pl.BlockSpec((2 * N_CLASSES, 1), lambda i, j: (0, 0)),    # ema b
        ],
        out_specs=pl.BlockSpec((None, 2 * N_CLASSES, tc),
                               lambda i, j: (i, 0, 0)),
        compiler_params=pltpu.CompilerParams(
            dimension_semantics=("parallel", "arbitrary")),
    )(scales, x3, d3, wm, bm, we, be)

    per_row = jnp.sum(out, axis=(0, 2))          # (2N,)
    return jnp.stack([jnp.sum(per_row[:N_CLASSES]),     # sum(p0*q1)
                      jnp.sum(per_row[N_CLASSES:])])    # sum(p1*q0)


# ----------------------------------------------------------------------------
# Plain-JAX head forward + Binary dice (used for the power-iteration gradient
# and for the correctness reference in __main__).
# ----------------------------------------------------------------------------
def _head_probs(x3, w, b):
    logits = jnp.einsum('nc,bcs->bns', w, x3,
                        precision=lax.Precision.HIGHEST) + b[None, :, None]
    return jax.nn.softmax(logits, axis=1)


def _binary_dice_loss(p, t, ep=DICE_EP):
    inter = 2.0 * jnp.sum(p * t) + ep
    union = jnp.sum(p) + jnp.sum(t) + ep
    return 1.0 - inter / union


def _vat_prologue(model_heads, ema_heads, x3, key, tile_cols):
    """Random d -> per-sample l2-normalize -> VAT power iteration.
    Returns the final (unnormalized) adversarial gradient g and per-sample
    1/(||g||+eps); the normalization is folded into a scalar 'scale' so the
    normalized direction is never materialized for the final Pallas pass."""
    (wm0, bm0), (wm1, bm1) = model_heads
    (we0, be0), (we1, be1) = ema_heads

    d0 = jax.random.uniform(key, x3.shape, jnp.float32) - 0.5
    inv = 1.0 / (jnp.sqrt(sample_sumsq(d0, tile_cols=tile_cols)) + NORM_EPS)
    d = d0 * inv[:, None, None]

    # ema predictions are constants for the inner optimization (torch.no_grad)
    q0 = lax.stop_gradient(_head_probs(x3, we0, be0))
    q1 = lax.stop_gradient(_head_probs(x3, we1, be1))

    # TODO(synk): the power-iteration backward uses jax.grad over this
    # plain-JAX head forward (pallas_call has no automatic VJP);
    # _disable_tracking_bn_stats is a no-op for the conv-head stand-in.
    def adv_distance(dd):
        xp = x3 + XI * dd
        p0 = _head_probs(xp, wm0, bm0)
        p1 = _head_probs(xp, wm1, bm1)
        return _binary_dice_loss(p0, q1) + _binary_dice_loss(p1, q0)

    g = d0
    for it in range(IP):
        g = jax.grad(adv_distance)(d)
        inv = 1.0 / (jnp.sqrt(sample_sumsq(g, tile_cols=tile_cols)) + NORM_EPS)
        if it + 1 < IP:
            d = g * inv[:, None, None]
    return g, inv


def vat3d_v1_mt_forward(model_heads, ema_heads, x, key, *,
                        tile_cols=65536, stream_dtype=jnp.float32):
    b, c = x.shape[0], x.shape[1]
    x3 = x.reshape(b, c, -1)                     # NC(DHW) view: no data movement
    s = x3.shape[-1]
    g, inv = _vat_prologue(model_heads, ema_heads, x3, key, tile_cols)
    scales = (EPI * inv).astype(jnp.float32)     # per-sample epi/(||g||+eps)

    (wm0, bm0), (wm1, bm1) = model_heads
    (we0, be0), (we1, be1) = ema_heads
    wm = jnp.concatenate([wm0, wm1], axis=0)                   # (2N, C)
    bm = jnp.concatenate([bm0, bm1], axis=0).reshape(-1, 1)    # (2N, 1)
    we = jnp.concatenate([we0, we1], axis=0)
    be = jnp.concatenate([be0, be1], axis=0).reshape(-1, 1)

    # stream_dtype=jnp.bfloat16 halves HBM bytes (recommended on v5e/v6e).
    inter = pair_dice_sums(x3.astype(stream_dtype), g.astype(stream_dtype),
                           scales, wm, bm, we, be, tile_cols=tile_cols)

    # Softmax identity: sum(p) = sum(q) = #valid columns = B*S (exact).
    n_valid = jnp.float32(b * s)
    union = 2.0 * n_valid + DICE_EP
    l01 = 1.0 - (2.0 * inter[0] + DICE_EP) / union
    l10 = 1.0 - (2.0 * inter[1] + DICE_EP) / union
    return l01 + l10


def vat3d_v1_mt_reference(model_heads, ema_heads, x, key, *, tile_cols=65536):
    """Plain-JAX value of the final pass (same prologue) for the test."""
    b, c = x.shape[0], x.shape[1]
    x3 = x.reshape(b, c, -1)
    g, inv = _vat_prologue(model_heads, ema_heads, x3, key, tile_cols)
    d_fin = g * inv[:, None, None]
    (wm0, bm0), (wm1, bm1) = model_heads
    (we0, be0), (we1, be1) = ema_heads
    xp = x3 + EPI * d_fin
    p0 = _head_probs(xp, wm0, bm0)
    p1 = _head_probs(xp, wm1, bm1)
    q0 = _head_probs(x3, we0, be0)
    q1 = _head_probs(x3, we1, be1)
    return _binary_dice_loss(p0, q1) + _binary_dice_loss(p1, q0)


if __name__ == "__main__":
    root = jax.random.PRNGKey(0)
    kx, kh, kd = jax.random.split(root, 3)

    B, C, D, H, W = 2, 4, 8, 16, 16              # 3D volume, S = D*H*W = 2048
    x = jax.random.normal(kx, (B, C, D, H, W), jnp.float32)

    def make_head(k):
        kw, kb = jax.random.split(k)
        w = 0.3 * jax.random.normal(kw, (N_CLASSES, C), jnp.float32)
        bb = 0.05 * jax.random.normal(kb, (N_CLASSES,), jnp.float32)
        return w, bb

    hk = jax.random.split(kh, 4)
    model_heads = (make_head(hk[0]), make_head(hk[1]))
    ema_heads = (make_head(hk[2]), make_head(hk[3]))

    # sanity-check the tiled sum-of-squares kernel against plain JAX
    # (tile 768 does not divide the flattened length -> exercises masking)
    probe = jax.random.uniform(kd, (B, C, D * H * W), jnp.float32) - 0.5
    ss_kernel = jax.block_until_ready(sample_sumsq(probe, tile_cols=768))
    ss_ref = jnp.sum(probe * probe, axis=(1, 2))
    assert jnp.allclose(ss_kernel, ss_ref, rtol=1e-4, atol=1e-3), (ss_kernel, ss_ref)

    # reference value (plain JAX final pass, same prologue)
    lds_ref = jax.block_until_ready(
        vat3d_v1_mt_reference(model_heads, ema_heads, x, kd, tile_cols=768))

    # 1) masked multi-tile path (768 does not divide S=2048)
    fwd_masked = jax.jit(functools.partial(vat3d_v1_mt_forward, tile_cols=768))
    lds_masked = jax.block_until_ready(fwd_masked(model_heads, ema_heads, x, kd))

    # 2) production default: full-S single tile, no masking
    fwd_full = jax.jit(vat3d_v1_mt_forward)
    lds_full = jax.block_until_ready(fwd_full(model_heads, ema_heads, x, kd))

    for lds in (lds_masked, lds_full):
        assert jnp.isfinite(lds), "non-finite loss"
        # tolerance covers accumulation-order + approx-reciprocal differences
        assert jnp.allclose(lds, lds_ref, rtol=5e-3, atol=5e-4), (lds, lds_ref)
    print("KERNEL_OK")
</pallas_src>

<mosaic_0001>
module attributes {stable_mosaic.version = 11 : i64} {
  func.func @_sumsq_kernel(%arg0: i32, %arg1: i32, %arg2: memref<1x8x768xf32, #tpu.memory_space<vmem>>, %arg3: memref<1x8x768xf32, #tpu.memory_space<vmem>>) attributes {dimension_semantics = [#tpu.dimension_semantics<parallel>, #tpu.dimension_semantics<arbitrary>], iteration_bounds = array<i64: 2, 2>, scalar_prefetch = 0 : i64, scratch_operands = 0 : i64, tpu.core_type = #tpu.core_type<tc>, window_params = [{transform_indices = @transform_0, window_bounds = array<i64: 1, 8, 768>}, {transform_indices = @transform_1, window_bounds = array<i64: 1, 8, 768>}]} {
    %c0_i32 = arith.constant 0 : i32
    %0 = arith.cmpi eq, %arg1, %c0_i32 : i32
    %1 = arith.extui %0 : i1 to i32
    %c0_i32_0 = arith.constant 0 : i32
    %2 = arith.cmpi ne, %1, %c0_i32_0 : i32
    scf.if %2 {
      %cst = arith.constant 0.000000e+00 : f32
      %12 = vector.broadcast %cst : f32 to vector<8x768xf32>
      %c0_5 = arith.constant 0 : index
      %c0_6 = arith.constant 0 : index
      %c0_7 = arith.constant 0 : index
      %13 = vector.load %arg3[%c0_5, %c0_6, %c0_7] : memref<1x8x768xf32, #tpu.memory_space<vmem>>, vector<1x8x768xf32>
      %14 = vector.shape_cast %13 : vector<1x8x768xf32> to vector<8x768xf32>
      %15 = vector.shape_cast %12 : vector<8x768xf32> to vector<1x8x768xf32>
      tpu.vector_store %arg3[%c0_5, %c0_6, %c0_7], %15 {strides = array<i32>} : memref<1x8x768xf32, #tpu.memory_space<vmem>>, vector<1x8x768xf32>,
    } else {
    }
    %c0 = arith.constant 0 : index
    %c0_1 = arith.constant 0 : index
    %c0_2 = arith.constant 0 : index
    %3 = vector.load %arg2[%c0, %c0_1, %c0_2] : memref<1x8x768xf32, #tpu.memory_space<vmem>>, vector<1x8x768xf32>
    %4 = vector.shape_cast %3 : vector<1x8x768xf32> to vector<8x768xf32>
    %5 = arith.mulf %4, %4 : vector<8x768xf32>
    %c1_i32 = arith.constant 1 : i32
    %6 = arith.cmpi eq, %arg1, %c1_i32 : i32
    %7 = arith.extui %6 : i1 to i32
    %c0_i32_3 = arith.constant 0 : i32
    %8 = arith.cmpi ne, %7, %c0_i32_3 : i32
    scf.if %8 {
      %12 = tpu.iota {dimensions = array<i32: 1>} : vector<8x768xi32>
      %c0_5 = arith.constant 0 : index
      %c0_6 = arith.constant 0 : index
      %c0_7 = arith.constant 0 : index
      %13 = vector.load %arg3[%c0_5, %c0_6, %c0_7] : memref<1x8x768xf32, #tpu.memory_space<vmem>>, vector<1x8x768xf32>
      %14 = vector.shape_cast %13 : vector<1x8x768xf32> to vector<8x768xf32>
      %c768_i32 = arith.constant 768 : i32
      %15 = arith.muli %arg1, %c768_i32 : i32
      %16 = vector.broadcast %15 : i32 to vector<8x768xi32>
      %17 = arith.addi %16, %12 : vector<8x768xi32>
      %c1024_i32 = arith.constant 1024 : i32
      %18 = vector.broadcast %c1024_i32 : i32 to vector<8x768xi32>
      %19 = arith.cmpi slt, %17, %18 : vector<8x768xi32>
      %cst = arith.constant 0.000000e+00 : f32
      %20 = vector.broadcast %cst : f32 to vector<8x768xf32>
      %21 = arith.select %19, %5, %20 : vector<8x768xi1>, vector<8x768xf32>
      %22 = arith.addf %14, %21 : vector<8x768xf32>
      %c0_8 = arith.constant 0 : index
      %c0_9 = arith.constant 0 : index
      %c0_10 = arith.constant 0 : index
      %23 = vector.load %arg3[%c0_8, %c0_9, %c0_10] : memref<1x8x768xf32, #tpu.memory_space<vmem>>, vector<1x8x768xf32>
      %24 = vector.shape_cast %23 : vector<1x8x768xf32> to vector<8x768xf32>
      %25 = vector.shape_cast %22 : vector<8x768xf32> to vector<1x8x768xf32>
      tpu.vector_store %arg3[%c0_8, %c0_9, %c0_10], %25 {strides = array<i32>} : memref<1x8x768xf32, #tpu.memory_space<vmem>>, vector<1x8x768xf32>,
    } else {
    }
    %true = arith.constant true
    %9 = arith.xori %6, %true : i1
    %10 = arith.extui %9 : i1 to i32
    %c0_i32_4 = arith.constant 0 : i32
    %11 = arith.cmpi ne, %10, %c0_i32_4 : i32
    scf.if %11 {
      %c0_5 = arith.constant 0 : index
      %c0_6 = arith.constant 0 : index
      %c0_7 = arith.constant 0 : index
      %12 = vector.load %arg3[%c0_5, %c0_6, %c0_7] : memref<1x8x768xf32, #tpu.memory_space<vmem>>, vector<1x8x768xf32>
      %13 = vector.shape_cast %12 : vector<1x8x768xf32> to vector<8x768xf32>
      %14 = arith.addf %13, %5 : vector<8x768xf32>
      %c0_8 = arith.constant 0 : index
      %c0_9 = arith.constant 0 : index
      %c0_10 = arith.constant 0 : index
      %15 = vector.load %arg3[%c0_8, %c0_9, %c0_10] : memref<1x8x768xf32, #tpu.memory_space<vmem>>, vector<1x8x768xf32>
      %16 = vector.shape_cast %15 : vector<1x8x768xf32> to vector<8x768xf32>
      %17 = vector.shape_cast %14 : vector<8x768xf32> to vector<1x8x768xf32>
      tpu.vector_store %arg3[%c0_8, %c0_9, %c0_10], %17 {strides = array<i32>} : memref<1x8x768xf32, #tpu.memory_space<vmem>>, vector<1x8x768xf32>,
    } else {
    }
    return
  }
  func.func @transform_0(%arg0: i32, %arg1: i32) -> (i32, i32, i32) {
    %c0_i32 = arith.constant 0 : i32
    %c0_i32_0 = arith.constant 0 : i32
    return %arg0, %c0_i32, %arg1 : i32, i32, i32
  }
  func.func @transform_1(%arg0: i32, %arg1: i32) -> (i32, i32, i32) {
    %c0_i32 = arith.constant 0 : i32
    %c0_i32_0 = arith.constant 0 : i32
    %c0_i32_1 = arith.constant 0 : i32
    return %arg0, %c0_i32, %c0_i32_0 : i32, i32, i32
  }
}

</mosaic_0001>

<llo_original>
// kernel: tpu_custom_call.1
$region0: #{tpu_custom_call.1}
  #allocation0 [shape = 'u32[]', space=smem, size = 0x4, offset = 0x4, fixed_abs, tag = 'smem constant byte address 0x4 - core index']
  #allocation1 [shape = 'u32[144,128]{1,0:T(1,128)}', space=vmem, size = 0x12000, scoped, tag = 'internal scratch']
  %s0 = inlined_call_operand.hbm [shape: f32[2,8,1024], index: 0, kind: input, shape index: {}]
  %s1 = inlined_call_operand.hbm [shape: f32[2,8,768], index: 1, kind: output, shape index: {}]
  %s2 = sld [smem:[#allocation0]]
  $region53: #{tpu_custom_call.1} parent=0
    _
  %s4 = ssub.s32 1, %s2
  %s5 = scalar_select 0, %s4, %s2
  $region1: #{tpu_custom_call.1} parent=0
    #allocation2 [shape = 'u8[49152]{0}', space=vmem, size = 0xc000, scoped, tag = 'input window, operand 0']
    #allocation3 [shape = 's32[2]{0}', space=sflag, size = 0x8, scoped, tag = 'scoped memory for tpu_custom_call.1']
    #allocation4 [shape = 's32[2]{0}', space=sflag, size = 0x8, scoped, tag = 'scoped memory for tpu_custom_call.1']
    #allocation5 [shape = 'u8[49152]{0}', space=vmem, size = 0xc000, scoped, tag = 'output window, operand 0']
    %6 = vsyncpa [#allocation3], 0
    %s7 = scalar_lea.sflag [#allocation3], 1
    %8 = vsyncpa %s7, 0
    %9 = vsyncpa [#allocation4], 0
    %s10 = scalar_lea.sflag [#allocation4], 1
    %11 = vsyncpa %s10, 0
    loop: start=0, step=1, limit=6
    $region2: #{tpu_custom_call.1} parent=1 // loop_pre_header
      _
    $region3: #{tpu_custom_call.1} parent=1 // loop_header
      %s13 = sphi 0, %s17
      %p14 = scmp.ge.s32.totalorder %s13, 6
      %s20 = sphi 0, %s32
      %s21 = sphi 0, %s28
      %s22 = sphi 0, %s20
      %s23 = sphi 0, %s21
      %s24 = sphi 0, %s22
      %s25 = sphi 0, %s23
      %s37 = sphi 0, %s39
      %s40 = sphi 0, %s37
      %s41 = sphi 0, %s40
      %s57 = sphi 0, %s41
      %s63 = sphi 0, %s65
      %s66 = sphi 0, %s63
      %s67 = sphi 0, %s66
      %s83 = sphi 0, %s67
    $region4: #{tpu_custom_call.1} parent=1 // loop_header_branch
      %16 = sbr.rel (%p14) target = $region8
    $region5: #{tpu_custom_call.1} parent=1 // loop_body
      %s18 = ssub.s32 %s13, 1
      %s19 = ssub.s32 %s13, 2
      %s26 = sadd.s32 1, %s21
      %p27 = scmp.ge.s32.totalorder %s26, 2
      %s28 = scalar_select %p27, 0, %s26
      %s29 = sadd.s32 1, %s20
      %s30 = scalar_select %p27, %s29, %s20
      %p31 = scmp.ge.s32.totalorder %s30, 2
      %s32 = scalar_select %p31, 0, %s30
      %s33 = ssub.s32 %s20, %s32
      %s34 = ssub.s32 %s21, %s28
      %s35 = sor.u32 %s33, %s34
      %p36 = scmp.eq.s32.totalorder %s35, 0
      %s38 = sadd.s32 %s37, 1
      %s39 = scalar_select %p36, %s37, %s38
      %p42 = pneg %p36
      %p43 = scmp.eq.s32.totalorder %s13, 3
      %p44 = por %p42, %p43
      %p45 = scmp.ne.s32.totalorder %s37, %s40
      %p46 = scmp.eq.s32.totalorder %s13, 0
      %p47 = por %p45, %p46
      %p48 = scmp.ne.s32.totalorder %s37, %s40
      %p49 = scmp.eq.s32.totalorder %s18, 3
      %p50 = por %p48, %p49
      %p51 = scmp.ne.s32.totalorder %s40, %s41
      %p52 = scmp.eq.s32.totalorder %s18, 0
      %p53 = por %p51, %p52
      %p54 = scmp.ne.s32.totalorder %s40, %s41
      %p55 = scmp.eq.s32.totalorder %s19, 3
      %p56 = por %p54, %p55
      %p58 = scmp.ne.s32.totalorder %s41, %s57
      %p59 = scmp.eq.s32.totalorder %s19, 0
      %p60 = por %p58, %p59
      %s61 = ssub.s32 %s20, %s32
      %p62 = scmp.eq.s32.totalorder %s61, 0
      %s64 = sadd.s32 %s63, 1
      %s65 = scalar_select %p62, %s63, %s64
      %p68 = pneg %p62
      %p69 = scmp.eq.s32.totalorder %s13, 3
      %p70 = por %p68, %p69
      %p71 = scmp.ne.s32.totalorder %s63, %s66
      %p72 = scmp.eq.s32.totalorder %s13, 0
      %p73 = por %p71, %p72
      %p74 = scmp.ne.s32.totalorder %s63, %s66
      %p75 = scmp.eq.s32.totalorder %s18, 3
      %p76 = por %p74, %p75
      %p77 = scmp.ne.s32.totalorder %s66, %s67
      %p78 = scmp.eq.s32.totalorder %s18, 0
      %p79 = por %p77, %p78
      %p80 = scmp.ne.s32.totalorder %s66, %s67
      %p81 = scmp.eq.s32.totalorder %s19, 3
      %p82 = por %p80, %p81
      %p84 = scmp.ne.s32.totalorder %s67, %s83
      %p85 = scmp.eq.s32.totalorder %s19, 0
      %p86 = por %p84, %p85
      %p87 = scmp.le.s32.totalorder 1, %s13
      %p88 = scmp.lt.s32.totalorder %s13, 5
      %p89 = pnand %p87, %p88
      %p90 = pneg %p89
      // Predicated region
      $region9: #{tpu_custom_call.1} parent=5 // pred_check
        _
      $region10: #{tpu_custom_call.1} parent=5 // pred_check_branch
        %92 = sbr.rel (%p89) target = $region12
      $region11: #{tpu_custom_call.1} parent=5 // pred_region
        %s93 = ssub.s32 %s13, 1
      $region12: #{tpu_custom_call.1} parent=5 // pred_fallthru
        _
      %p94 = scmp.lt.s32.totalorder %s13, 4
      // Predicated region
      $region13: #{tpu_custom_call.1} parent=5 // pred_check
        %p95 = pneg %p94
      $region14: #{tpu_custom_call.1} parent=5 // pred_check_branch
        %97 = sbr.rel (%p95) target = $region16
      $region15: #{tpu_custom_call.1} parent=5 // pred_region
        // Predicated region
        $region17: #{tpu_custom_call.1} parent=15 // pred_check
          %p98 = pneg %p47
        $region18: #{tpu_custom_call.1} parent=15 // pred_check_branch
          %100 = sbr.rel (%p98) target = $region20
        $region19: #{tpu_custom_call.1} parent=15 // pred_region
          %s101 = sand.u32 %s37, 1
          %s102 = scalar_lea.sflag [#allocation3], %s101
          %s103 = sand.u32 %s37, 1
          %s104 = smul.addr %s103, 48
          %s105 = scalar_lea.vmem [#allocation2], %s104
          %s106 = smul.u32 6, %s21
          %s107 = ssub.s32 8, %s106
          %p108 = scmp.lt.s32.totalorder %s107, 6
          %s109 = scalar_select %p108, %s107, 6
          %s110 = smul.u32 128, %s109
          %s112 = ssub.s32 768, %s110
          %113 = vsyncadd %s102, %s112
          %p114 = scmp.ne.s32.totalorder 0, %s110
          %s115 = smul.addr %s20, 8
          %s116 = sadd.s32 %s106, %s115
          %s117 = smul.addr %s116, 128
          %s118 = scalar_lea.hbm %s0, %s117
          %s119 = smul.u32 %s109, 8
          %s120 = sshll.u32 %s119, 4
          %s121 = sshll.u32 %s105, 4
          %s122 = int_to_ptr.vmem [resolvable:$true] %s121
          %124 = dma.hbm_to_vmem [thread:$0]  (%p114), %s118, %s120, %s122, %s102
        $region20: #{tpu_custom_call.1} parent=15 // pred_fallthru
          _
      $region16: #{tpu_custom_call.1} parent=5 // pred_fallthru
        _
      %p125 = scmp.le.s32.totalorder 1, %s13
      %p126 = scmp.lt.s32.totalorder %s13, 5
      %p127 = pnand %p125, %p126
      %p128 = pneg %p127
      // Predicated region
      $region21: #{tpu_custom_call.1} parent=5 // pred_check
        _
      $region22: #{tpu_custom_call.1} parent=5 // pred_check_branch
        %130 = sbr.rel (%p127) target = $region24
      $region23: #{tpu_custom_call.1} parent=5 // pred_region
        %s131 = ssub.s32 %s13, 1
        %s132 = sand.u32 %s40, 1
        %s133 = scalar_lea.sflag [#allocation3], %s132
        %s134 = sand.u32 %s40, 1
        %s135 = smul.addr %s134, 48
        %s136 = scalar_lea.vmem [#allocation2], %s135
        // Predicated region
        $region25: #{tpu_custom_call.1} parent=23 // pred_check
          %p137 = pneg %p53
        $region26: #{tpu_custom_call.1} parent=23 // pred_check_branch
          %139 = sbr.rel (%p137) target = $region28
        $region27: #{tpu_custom_call.1} parent=23 // pred_region
          %140 = dma.done %s133, 768
        $region28: #{tpu_custom_call.1} parent=23 // pred_fallthru
          _
        %s141 = sand.u32 %s40, 1
        %s142 = scalar_lea.sflag [#allocation3], %s141
        %s143 = sand.u32 %s40, 1
        %s144 = smul.addr %s143, 48
        %s145 = scalar_lea.vmem [#allocation2], %s144
        %p146 = pneg %p53
        %p147 = pneg %p50
        %p148 = pneg %p79
        %p149 = pneg %p76
        %s150 = sand.u32 %s66, 1
        %s151 = scalar_lea.sflag [#allocation4], %s150
        %s152 = sand.u32 %s66, 1
        %s153 = smul.addr %s152, 48
        %s154 = scalar_lea.vmem [#allocation5], %s153
        %s155 = smul.u32 6, %s23
        %s156 = ssub.s32 8, %s155
        %p157 = scmp.lt.s32.totalorder %s156, 6
        %s158 = scalar_select %p157, %s156, 6
        %s159 = smul.u32 128, %s158
        %p160 = scmp.eq.s32.totalorder %s23, 0
        // Predicated region
        $region29: #{tpu_custom_call.1} parent=23 // pred_check
          %p161 = pneg %p160
        $region30: #{tpu_custom_call.1} parent=23 // pred_check_branch
          %163 = sbr.rel (%p161) target = $region32
        $region31: #{tpu_custom_call.1} parent=23 // pred_region
          %164 = vst [vmem:[%s154] sm:$0xff] 0.0
          %165 = vst [vmem:[%s154 + $0x8] sm:$0xff] 0.0
          %166 = vst [vmem:[%s154 + $0x10] sm:$0xff] 0.0
          %167 = vst [vmem:[%s154 + $0x18] sm:$0xff] 0.0
          %168 = vst [vmem:[%s154 + $0x20] sm:$0xff] 0.0
          %169 = vst [vmem:[%s154 + $0x28] sm:$0xff] 0.0
        $region32: #{tpu_custom_call.1} parent=23 // pred_fallthru
          _
        %v170 = vld [vmem:[%s136] sm:$0xff]
        %v171 = vld [vmem:[%s136 + $0x8] sm:$0xff]
        %v172 = vld [vmem:[%s136 + $0x10] sm:$0xff]
        %v173 = vld [vmem:[%s136 + $0x18] sm:$0xff]
        %v174 = vld [vmem:[%s136 + $0x20] sm:$0xff]
        %v175 = vld [vmem:[%s136 + $0x28] sm:$0xff]
        %v176 = vmul.f32 %v170, %v170
        %v177 = vmul.f32 %v171, %v171
        %v178 = vmul.f32 %v172, %v172
        %v179 = vmul.f32 %v173, %v173
        %v180 = vmul.f32 %v174, %v174
        %v181 = vmul.f32 %v175, %v175
        %p182 = scmp.eq.s32.totalorder %s23, 1
        // Predicated region
        $region33: #{tpu_custom_call.1} parent=23 // pred_check
          %p183 = pneg %p182
        $region34: #{tpu_custom_call.1} parent=23 // pred_check_branch
          %185 = sbr.rel (%p183) target = $region36
        $region35: #{tpu_custom_call.1} parent=23 // pred_region
          %v186 = vlaneseq
          %v187 = vand.u32 %v186, 127
          %v188 = vadd.s32 %v187, 128
          %v189 = vadd.s32 %v187, 256
          %v190 = vadd.s32 %v187, 384
          %v191 = vadd.s32 %v187, 512
          %v192 = vadd.s32 %v187, 640
          %v193 = vld [vmem:[%s154] sm:$0xff]
          %v194 = vld [vmem:[%s154 + $0x8] sm:$0xff]
          %v195 = vld [vmem:[%s154 + $0x10] sm:$0xff]
          %v196 = vld [vmem:[%s154 + $0x18] sm:$0xff]
          %v197 = vld [vmem:[%s154 + $0x20] sm:$0xff]
          %v198 = vld [vmem:[%s154 + $0x28] sm:$0xff]
          %s199 = smul.u32 %s23, 768
          %v200 = vstv %s199
          %v201 = vadd.s32 %v200, %v187
          %v202 = vadd.s32 %v200, %v188
          %v203 = vadd.s32 %v200, %v189
          %v204 = vadd.s32 %v200, %v190
          %v205 = vadd.s32 %v200, %v191
          %v206 = vadd.s32 %v200, %v192
          %vm207 = vcmp.lt.s32.totalorder %v201, 1024
          %vm208 = vcmp.lt.s32.totalorder %v202, 1024
          %vm209 = vcmp.lt.s32.totalorder %v203, 1024
          %vm210 = vcmp.lt.s32.totalorder %v204, 1024
          %vm211 = vcmp.lt.s32.totalorder %v205, 1024
          %vm212 = vcmp.lt.s32.totalorder %v206, 1024
          %v213 = vsel %vm207, %v176, 0.0
          %v214 = vsel %vm208, %v177, 0.0
          %v215 = vsel %vm209, %v178, 0.0
          %v216 = vsel %vm210, %v179, 0.0
          %v217 = vsel %vm211, %v180, 0.0
          %v218 = vsel %vm212, %v181, 0.0
          %v219 = vadd.f32 %v193, %v213
          %v220 = vadd.f32 %v194, %v214
          %v221 = vadd.f32 %v195, %v215
          %v222 = vadd.f32 %v196, %v216
          %v223 = vadd.f32 %v197, %v217
          %v224 = vadd.f32 %v198, %v218
          %225 = vst [vmem:[%s154] sm:$0xff] %v219
          %226 = vst [vmem:[%s154 + $0x8] sm:$0xff] %v220
          %227 = vst [vmem:[%s154 + $0x10] sm:$0xff] %v221
          %228 = vst [vmem:[%s154 + $0x18] sm:$0xff] %v222
          %229 = vst [vmem:[%s154 + $0x20] sm:$0xff] %v223
          %230 = vst [vmem:[%s154 + $0x28] sm:$0xff] %v224
        $region36: #{tpu_custom_call.1} parent=23 // pred_fallthru
          _
        %p231 = scmp.ne.s32.totalorder %s23, 1
        // Predicated region
        $region37: #{tpu_custom_call.1} parent=23 // pred_check
          %p232 = pneg %p231
        $region38: #{tpu_custom_call.1} parent=23 // pred_check_branch
          %234 = sbr.rel (%p232) target = $region40
        $region39: #{tpu_custom_call.1} parent=23 // pred_region
          %v235 = vld [vmem:[%s154] sm:$0xff]
          %v236 = vld [vmem:[%s154 + $0x8] sm:$0xff]
          %v237 = vld [vmem:[%s154 + $0x10] sm:$0xff]
          %v238 = vld [vmem:[%s154 + $0x18] sm:$0xff]
          %v239 = vld [vmem:[%s154 + $0x20] sm:$0xff]
          %v240 = vld [vmem:[%s154 + $0x28] sm:$0xff]
          %v241 = vadd.f32 %v235, %v176
          %v242 = vadd.f32 %v236, %v177
          %v243 = vadd.f32 %v237, %v178
          %v244 = vadd.f32 %v238, %v179
          %v245 = vadd.f32 %v239, %v180
          %v246 = vadd.f32 %v240, %v181
          %247 = vst [vmem:[%s154] sm:$0xff] %v241
          %248 = vst [vmem:[%s154 + $0x8] sm:$0xff] %v242
          %249 = vst [vmem:[%s154 + $0x10] sm:$0xff] %v243
          %250 = vst [vmem:[%s154 + $0x18] sm:$0xff] %v244
          %251 = vst [vmem:[%s154 + $0x20] sm:$0xff] %v245
          %252 = vst [vmem:[%s154 + $0x28] sm:$0xff] %v246
        $region40: #{tpu_custom_call.1} parent=23 // pred_fallthru
          _
        %s253 = sand.u32 %s66, 1
        %s254 = scalar_lea.sflag [#allocation4], %s253
        %s255 = sand.u32 %s66, 1
        %s256 = smul.addr %s255, 48
        %s257 = scalar_lea.vmem [#allocation5], %s256
        // Predicated region
        $region41: #{tpu_custom_call.1} parent=23 // pred_check
          %p258 = pneg %p76
        $region42: #{tpu_custom_call.1} parent=23 // pred_check_branch
          %260 = sbr.rel (%p258) target = $region44
        $region43: #{tpu_custom_call.1} parent=23 // pred_region
          %s262 = ssub.s32 768, 768
          %263 = vsyncadd %s254, %s262
          %s264 = smul.addr %s22, 6
          %s265 = smul.addr %s264, 128
          %s266 = scalar_lea.hbm %s1, %s265
          %s268 = sshll.u32 %s257, 4
          %s269 = int_to_ptr.vmem [resolvable:$true] %s268
          %271 = dma.vmem_to_hbm [thread:$0]  %s269, 768, %s266, %s254
        $region44: #{tpu_custom_call.1} parent=23 // pred_fallthru
          _
      $region24: #{tpu_custom_call.1} parent=5 // pred_fallthru
        _
      %p272 = scmp.le.s32.totalorder 2, %s13
      // Predicated region
      $region45: #{tpu_custom_call.1} parent=5 // pred_check
        %p273 = pneg %p272
      $region46: #{tpu_custom_call.1} parent=5 // pred_check_branch
        %275 = sbr.rel (%p273) target = $region48
      $region47: #{tpu_custom_call.1} parent=5 // pred_region
        %s276 = ssub.s32 %s13, 2
        // Predicated region
        $region49: #{tpu_custom_call.1} parent=47 // pred_check
          %p277 = pneg %p82
        $region50: #{tpu_custom_call.1} parent=47 // pred_check_branch
          %279 = sbr.rel (%p277) target = $region52
        $region51: #{tpu_custom_call.1} parent=47 // pred_region
          %s280 = sand.u32 %s67, 1
          %s281 = scalar_lea.sflag [#allocation4], %s280
          %s282 = sand.u32 %s67, 1
          %s283 = smul.addr %s282, 48
          %s284 = scalar_lea.vmem [#allocation5], %s283
          %285 = dma.done %s281, 768
        $region52: #{tpu_custom_call.1} parent=47 // pred_fallthru
          _
      $region48: #{tpu_custom_call.1} parent=5 // pred_fallthru
        _
    $region6: #{tpu_custom_call.1} parent=1 // loop_footer
      %s17 = sadd.s32 1, %s13
    $region7: #{tpu_custom_call.1} parent=1 // loop_footer_branch
      %12 = sbr.rel target = $region3
    $region8: #{tpu_custom_call.1} parent=1 // loop_exit
      _
    %286 = vsyncpa [#allocation3], 1
    %s287 = scalar_lea.sflag [#allocation3], 1
    %288 = vsyncpa %s287, 1
    %289 = vsyncpa [#allocation4], 1
    %s290 = scalar_lea.sflag [#allocation4], 1
    %291 = vsyncpa %s290, 1

</llo_original>
